<compile_context>
chip_gen: v7x
topology: tpu7x:2x2x1
jax: 0.10.0
libtpu: 0.0.40
codegen_flags: <defaults>
</compile_context>

<pallas_src>
import jax
import jax.numpy as jnp
from jax.experimental import pallas as pl
from jax.experimental.pallas import tpu as pltpu


def get_rot_transformation_mat(dhead: int) -> jnp.ndarray:
    """Deterministic (parameter-free) rotary transformation matrix, shape (dhead, dhead)."""
    m = jnp.zeros((dhead, dhead), dtype=jnp.float32)
    even = jnp.arange(0, dhead, 2)
    odd = jnp.arange(1, dhead, 2)
    m = m.at[even, odd].set(1.0)
    m = m.at[odd, even].set(-1.0)
    return m


def _rotary_kernel(x_ref, cos_ref, sin_ref, o_ref):
    # x_ref/o_ref: (tile_bh, tile_s, D); cos_ref/sin_ref: (tile_s, D) broadcast over bh.
    x = x_ref[...]
    d = x.shape[-1]
    # pltpu.roll follows jnp.roll semantics: roll(x, s)[..., j] == x[..., (j - s) % D].
    # Shifts must be non-negative, so "-1" is expressed as D-1.
    x_plus1 = pltpu.roll(x, shift=d - 1, axis=2)   # x_plus1[..., j]  == x[..., (j + 1) % D]
    x_minus1 = pltpu.roll(x, shift=1, axis=2)      # x_minus1[..., j] == x[..., (j - 1) % D]
    # Pairwise swap: even lanes take the right neighbor, odd lanes the left neighbor.
    # Circular wraparound lanes (j=0 odd-roll, j=D-1 even-roll) are never selected.
    lane = jax.lax.broadcasted_iota(jnp.int32, x.shape, 2)
    swapped = jnp.where(lane % 2 == 0, x_plus1, x_minus1)
    out = cos_ref[...] * x + sin_ref[...] * swapped
    o_ref[...] = out.astype(o_ref.dtype)


def _vmem_capacity_bytes() -> int:
    try:
        return int(pltpu.get_tpu_info().vmem_capacity_bytes)
    except Exception:
        return 64 << 20  # conservative: v7x per-TensorCore VMEM


def _apply_rotary(x, cos2, sin_signed2):
    """x: (B, H, S, D); cos2/sin_signed2: (S, D) tables (sin already sign-folded)."""
    B, H, S, D = x.shape
    BH = B * H
    xf = x.reshape(BH, S, D)
    itemsize = jnp.dtype(x.dtype).itemsize

    # --- tiling: lane-dense last dim = D; seq tile full (<=1024) else 512 (mult of 8/16/32).
    tile_s = S if S <= 1024 else 512
    row_bytes = tile_s * D * itemsize
    target_block_bytes = 4 << 20  # ~4 MiB x-block amortizes per-grid-step overhead
    tile_bh = int(min(BH, max(1, target_block_bytes // row_bytes)))

    n_s = pl.cdiv(S, tile_s)
    n_bh = pl.cdiv(BH, tile_bh)
    # Guarantee >= 2 blocks along the parallel axes so both v7x TensorCores get work.
    if n_s * n_bh < 2 and BH >= 2:
        tile_bh = pl.cdiv(BH, 2)
        n_bh = pl.cdiv(BH, tile_bh)

    # --- exact VMEM accounting: double-buffered in + out blocks, double-buffered tables, margin.
    block_bytes = tile_bh * tile_s * D * itemsize
    table_bytes = tile_s * D * jnp.dtype(cos2.dtype).itemsize
    need = 2 * (2 * block_bytes) + 2 * (2 * table_bytes) + (2 << 20)
    vmem_limit = int(min(max(need, 16 << 20), int(0.9 * _vmem_capacity_bytes())))

    out = pl.pallas_call(
        _rotary_kernel,
        out_shape=jax.ShapeDtypeStruct((BH, S, D), x.dtype),
        grid_spec=pltpu.PrefetchScalarGridSpec(
            num_scalar_prefetch=0,
            # seq axis OUTER, bh axis INNER: table block index is constant across
            # consecutive inner steps, so Pallas skips re-DMA of cos/sin.
            grid=(n_s, n_bh),
            in_specs=[
                pl.BlockSpec((tile_bh, tile_s, D), lambda j, i: (i, j, 0)),
                pl.BlockSpec((tile_s, D), lambda j, i: (j, 0)),
                pl.BlockSpec((tile_s, D), lambda j, i: (j, 0)),
            ],
            out_specs=pl.BlockSpec((tile_bh, tile_s, D), lambda j, i: (i, j, 0)),
        ),
        compiler_params=pltpu.CompilerParams(
            dimension_semantics=("parallel", "parallel"),
            vmem_limit_bytes=vmem_limit,
        ),
    )(xf, cos2, sin_signed2)
    return out.reshape(B, H, S, D)


class TtLlamaRotaryPallas:
    """JAX/Pallas equivalent of TtLlamaRotary.forward: (xq, xk, cos, sin) -> (xq', xk')."""

    def __init__(self, hidden_size: int, n_heads: int, n_kv_heads: int):
        self.n_heads = n_heads
        self.n_kv_heads = n_kv_heads
        self.head_dim = hidden_size // n_heads

        def fwd(xq, xk, cos, sin):
            # cos/sin arrive as (1, 1, S, D) like the torch module; broadcasting over
            # batch & heads replaces ttnn.repeat. Fold the +-1 signs of the transformation
            # matrix into a single sin table so the kernel is MXU-free:
            #   out = cos*x + sin_signed * swap_pairs(x)
            S, D = cos.shape[-2], cos.shape[-1]
            cos2 = cos.reshape(S, D).astype(xq.dtype)
            sin2 = sin.reshape(S, D)
            even = (jnp.arange(D) % 2) == 0
            sin_signed = jnp.where(even, -sin2, sin2).astype(xq.dtype)
            xq_out = _apply_rotary(xq, cos2, sin_signed)
            xk_out = _apply_rotary(xk, cos2, sin_signed)
            return xq_out, xk_out

        # Single jit over both q and k passes so launches / table prep overlap.
        self._fwd = jax.jit(fwd)

    def __call__(self, xq, xk, cos, sin):
        return self._fwd(xq, xk, cos, sin)


def _reference(xq, xk, cos, sin, t):
    def apply(x):
        x_t = jnp.einsum("bhsd,de->bhse", x, t)
        return cos * x + sin * x_t

    return apply(xq), apply(xk)


if __name__ == "__main__":
    # Small shapes consistent with the module; head_dim=128 matches Llama2-70B
    # (and keeps the last dim lane-dense on TPU).
    batch, n_heads, n_kv_heads, seq = 2, 4, 2, 16
    head_dim = 128
    hidden = n_heads * head_dim

    key = jax.random.PRNGKey(0)
    k1, k2 = jax.random.split(key, 2)
    xq = jax.random.normal(k1, (batch, n_heads, seq, head_dim), dtype=jnp.float32)
    xk = jax.random.normal(k2, (batch, n_kv_heads, seq, head_dim), dtype=jnp.float32)

    # deterministic rotary cos/sin tables (interleaved frequencies), shape (1, 1, seq, head_dim)
    pos = jnp.arange(seq, dtype=jnp.float32)[:, None]
    inv_freq = 1.0 / (10000.0 ** (jnp.arange(0, head_dim, 2, dtype=jnp.float32) / head_dim))
    angles = jnp.repeat(pos * inv_freq[None, :], 2, axis=-1)    # (seq, head_dim)
    cos = jnp.cos(angles)[None, None, :, :]
    sin = jnp.sin(angles)[None, None, :, :]

    module = TtLlamaRotaryPallas(hidden_size=hidden, n_heads=n_heads, n_kv_heads=n_kv_heads)
    xq_out, xk_out = module(xq, xk, cos, sin)
    jax.block_until_ready((xq_out, xk_out))

    # correctness check against the exact transformation-matrix reference
    t = get_rot_transformation_mat(head_dim)
    xq_ref, xk_ref = _reference(xq, xk, cos, sin, t)
    assert jnp.allclose(xq_out, xq_ref, atol=1e-5, rtol=1e-5)
    assert jnp.allclose(xk_out, xk_ref, atol=1e-5, rtol=1e-5)

    print("KERNEL_OK")
</pallas_src>

<mosaic_0001>
module attributes {stable_mosaic.version = 11 : i64} {
  func.func @_rotary_kernel(%arg0: i32, %arg1: i32, %arg2: memref<4x16x128xf32, #tpu.memory_space<vmem>>, %arg3: memref<16x128xf32, #tpu.memory_space<vmem>>, %arg4: memref<16x128xf32, #tpu.memory_space<vmem>>, %arg5: memref<4x16x128xf32, #tpu.memory_space<vmem>>) attributes {dimension_semantics = [#tpu.dimension_semantics<parallel>, #tpu.dimension_semantics<parallel>], iteration_bounds = array<i64: 1, 2>, scalar_prefetch = 0 : i64, scratch_operands = 0 : i64, tpu.core_type = #tpu.core_type<tc>, window_params = [{transform_indices = @transform_0, window_bounds = array<i64: 4, 16, 128>}, {transform_indices = @transform_1, window_bounds = array<i64: 16, 128>}, {transform_indices = @transform_2, window_bounds = array<i64: 16, 128>}, {transform_indices = @transform_3, window_bounds = array<i64: 4, 16, 128>}]} {
    %c0 = arith.constant 0 : index
    %c0_0 = arith.constant 0 : index
    %c0_1 = arith.constant 0 : index
    %0 = vector.load %arg2[%c0, %c0_0, %c0_1] : memref<4x16x128xf32, #tpu.memory_space<vmem>>, vector<4x16x128xf32>
    %c127_i32 = arith.constant 127 : i32
    %1 = tpu.dynamic_rotate %0 by %c127_i32 dim 2 : vector<4x16x128xf32>, i32 -> vector<4x16x128xf32>
    %c1_i32 = arith.constant 1 : i32
    %2 = tpu.dynamic_rotate %0 by %c1_i32 dim 2 : vector<4x16x128xf32>, i32 -> vector<4x16x128xf32>
    %3 = tpu.iota {dimensions = array<i32: 2>} : vector<4x16x128xi32>
    %c2_i32 = arith.constant 2 : i32
    %c0_i32 = arith.constant 0 : i32
    %4 = arith.cmpi eq, %c2_i32, %c0_i32 : i32
    %c1_i32_2 = arith.constant 1 : i32
    %5 = arith.select %4, %c1_i32_2, %c2_i32 : i32
    %6 = vector.broadcast %5 : i32 to vector<4x16x128xi32>
    %7 = arith.remsi %3, %6 : vector<4x16x128xi32>
    %c0_i32_3 = arith.constant 0 : i32
    %8 = vector.broadcast %c0_i32_3 : i32 to vector<4x16x128xi32>
    %9 = arith.cmpi ne, %7, %8 : vector<4x16x128xi32>
    %c0_i32_4 = arith.constant 0 : i32
    %10 = vector.broadcast %c0_i32_4 : i32 to vector<4x16x128xi32>
    %11 = arith.cmpi slt, %7, %10 : vector<4x16x128xi32>
    %c0_i32_5 = arith.constant 0 : i32
    %12 = arith.cmpi slt, %5, %c0_i32_5 : i32
    %13 = vector.broadcast %12 : i1 to vector<4x16x128xi1>
    %14 = vector.broadcast %13 : vector<4x16x128xi1> to vector<4x16x128xi1>
    %15 = arith.xori %11, %14 : vector<4x16x128xi1>
    %16 = arith.andi %15, %9 : vector<4x16x128xi1>
    %17 = vector.broadcast %5 : i32 to vector<4x16x128xi32>
    %18 = arith.addi %7, %17 : vector<4x16x128xi32>
    %19 = arith.select %16, %18, %7 : vector<4x16x128xi1>, vector<4x16x128xi32>
    %c0_i32_6 = arith.constant 0 : i32
    %20 = vector.broadcast %c0_i32_6 : i32 to vector<4x16x128xi32>
    %21 = arith.cmpi eq, %19, %20 : vector<4x16x128xi32>
    %22 = arith.select %21, %1, %2 : vector<4x16x128xi1>, vector<4x16x128xf32>
    %c0_7 = arith.constant 0 : index
    %c0_8 = arith.constant 0 : index
    %23 = vector.load %arg3[%c0_7, %c0_8] : memref<16x128xf32, #tpu.memory_space<vmem>>, vector<16x128xf32>
    %24 = vector.shape_cast %23 : vector<16x128xf32> to vector<1x16x128xf32>
    %25 = vector.broadcast %24 : vector<1x16x128xf32> to vector<4x16x128xf32>
    %26 = arith.mulf %25, %0 : vector<4x16x128xf32>
    %c0_9 = arith.constant 0 : index
    %c0_10 = arith.constant 0 : index
    %27 = vector.load %arg4[%c0_9, %c0_10] : memref<16x128xf32, #tpu.memory_space<vmem>>, vector<16x128xf32>
    %28 = vector.shape_cast %27 : vector<16x128xf32> to vector<1x16x128xf32>
    %29 = vector.broadcast %28 : vector<1x16x128xf32> to vector<4x16x128xf32>
    %30 = arith.mulf %29, %22 : vector<4x16x128xf32>
    %31 = arith.addf %26, %30 : vector<4x16x128xf32>
    %c0_11 = arith.constant 0 : index
    %c0_12 = arith.constant 0 : index
    %c0_13 = arith.constant 0 : index
    %32 = vector.load %arg5[%c0_11, %c0_12, %c0_13] : memref<4x16x128xf32, #tpu.memory_space<vmem>>, vector<4x16x128xf32>
    tpu.vector_store %arg5[%c0_11, %c0_12, %c0_13], %31 {strides = array<i32>} : memref<4x16x128xf32, #tpu.memory_space<vmem>>, vector<4x16x128xf32>,
    return
  }
  func.func @transform_0(%arg0: i32, %arg1: i32) -> (i32, i32, i32) {
    %c0_i32 = arith.constant 0 : i32
    %c0_i32_0 = arith.constant 0 : i32
    return %arg1, %arg0, %c0_i32 : i32, i32, i32
  }
  func.func @transform_1(%arg0: i32, %arg1: i32) -> (i32, i32) {
    %c0_i32 = arith.constant 0 : i32
    %c0_i32_0 = arith.constant 0 : i32
    return %arg0, %c0_i32 : i32, i32
  }
  func.func @transform_2(%arg0: i32, %arg1: i32) -> (i32, i32) {
    %c0_i32 = arith.constant 0 : i32
    %c0_i32_0 = arith.constant 0 : i32
    return %arg0, %c0_i32 : i32, i32
  }
  func.func @transform_3(%arg0: i32, %arg1: i32) -> (i32, i32, i32) {
    %c0_i32 = arith.constant 0 : i32
    %c0_i32_0 = arith.constant 0 : i32
    return %arg1, %arg0, %c0_i32 : i32, i32, i32
  }
}

module attributes {stable_mosaic.version = 11 : i64} {
  func.func @_rotary_kernel(%arg0: i32, %arg1: i32, %arg2: memref<2x16x128xf32, #tpu.memory_space<vmem>>, %arg3: memref<16x128xf32, #tpu.memory_space<vmem>>, %arg4: memref<16x128xf32, #tpu.memory_space<vmem>>, %arg5: memref<2x16x128xf32, #tpu.memory_space<vmem>>) attributes {dimension_semantics = [#tpu.dimension_semantics<parallel>, #tpu.dimension_semantics<parallel>], iteration_bounds = array<i64: 1, 2>, scalar_prefetch = 0 : i64, scratch_operands = 0 : i64, tpu.core_type = #tpu.core_type<tc>, window_params = [{transform_indices = @transform_0, window_bounds = array<i64: 2, 16, 128>}, {transform_indices = @transform_1, window_bounds = array<i64: 16, 128>}, {transform_indices = @transform_2, window_bounds = array<i64: 16, 128>}, {transform_indices = @transform_3, window_bounds = array<i64: 2, 16, 128>}]} {
    %c0 = arith.constant 0 : index
    %c0_0 = arith.constant 0 : index
    %c0_1 = arith.constant 0 : index
    %0 = vector.load %arg2[%c0, %c0_0, %c0_1] : memref<2x16x128xf32, #tpu.memory_space<vmem>>, vector<2x16x128xf32>
    %c127_i32 = arith.constant 127 : i32
    %1 = tpu.dynamic_rotate %0 by %c127_i32 dim 2 : vector<2x16x128xf32>, i32 -> vector<2x16x128xf32>
    %c1_i32 = arith.constant 1 : i32
    %2 = tpu.dynamic_rotate %0 by %c1_i32 dim 2 : vector<2x16x128xf32>, i32 -> vector<2x16x128xf32>
    %3 = tpu.iota {dimensions = array<i32: 2>} : vector<2x16x128xi32>
    %c2_i32 = arith.constant 2 : i32
    %c0_i32 = arith.constant 0 : i32
    %4 = arith.cmpi eq, %c2_i32, %c0_i32 : i32
    %c1_i32_2 = arith.constant 1 : i32
    %5 = arith.select %4, %c1_i32_2, %c2_i32 : i32
    %6 = vector.broadcast %5 : i32 to vector<2x16x128xi32>
    %7 = arith.remsi %3, %6 : vector<2x16x128xi32>
    %c0_i32_3 = arith.constant 0 : i32
    %8 = vector.broadcast %c0_i32_3 : i32 to vector<2x16x128xi32>
    %9 = arith.cmpi ne, %7, %8 : vector<2x16x128xi32>
    %c0_i32_4 = arith.constant 0 : i32
    %10 = vector.broadcast %c0_i32_4 : i32 to vector<2x16x128xi32>
    %11 = arith.cmpi slt, %7, %10 : vector<2x16x128xi32>
    %c0_i32_5 = arith.constant 0 : i32
    %12 = arith.cmpi slt, %5, %c0_i32_5 : i32
    %13 = vector.broadcast %12 : i1 to vector<2x16x128xi1>
    %14 = vector.broadcast %13 : vector<2x16x128xi1> to vector<2x16x128xi1>
    %15 = arith.xori %11, %14 : vector<2x16x128xi1>
    %16 = arith.andi %15, %9 : vector<2x16x128xi1>
    %17 = vector.broadcast %5 : i32 to vector<2x16x128xi32>
    %18 = arith.addi %7, %17 : vector<2x16x128xi32>
    %19 = arith.select %16, %18, %7 : vector<2x16x128xi1>, vector<2x16x128xi32>
    %c0_i32_6 = arith.constant 0 : i32
    %20 = vector.broadcast %c0_i32_6 : i32 to vector<2x16x128xi32>
    %21 = arith.cmpi eq, %19, %20 : vector<2x16x128xi32>
    %22 = arith.select %21, %1, %2 : vector<2x16x128xi1>, vector<2x16x128xf32>
    %c0_7 = arith.constant 0 : index
    %c0_8 = arith.constant 0 : index
    %23 = vector.load %arg3[%c0_7, %c0_8] : memref<16x128xf32, #tpu.memory_space<vmem>>, vector<16x128xf32>
    %24 = vector.shape_cast %23 : vector<16x128xf32> to vector<1x16x128xf32>
    %25 = vector.broadcast %24 : vector<1x16x128xf32> to vector<2x16x128xf32>
    %26 = arith.mulf %25, %0 : vector<2x16x128xf32>
    %c0_9 = arith.constant 0 : index
    %c0_10 = arith.constant 0 : index
    %27 = vector.load %arg4[%c0_9, %c0_10] : memref<16x128xf32, #tpu.memory_space<vmem>>, vector<16x128xf32>
    %28 = vector.shape_cast %27 : vector<16x128xf32> to vector<1x16x128xf32>
    %29 = vector.broadcast %28 : vector<1x16x128xf32> to vector<2x16x128xf32>
    %30 = arith.mulf %29, %22 : vector<2x16x128xf32>
    %31 = arith.addf %26, %30 : vector<2x16x128xf32>
    %c0_11 = arith.constant 0 : index
    %c0_12 = arith.constant 0 : index
    %c0_13 = arith.constant 0 : index
    %32 = vector.load %arg5[%c0_11, %c0_12, %c0_13] : memref<2x16x128xf32, #tpu.memory_space<vmem>>, vector<2x16x128xf32>
    tpu.vector_store %arg5[%c0_11, %c0_12, %c0_13], %31 {strides = array<i32>} : memref<2x16x128xf32, #tpu.memory_space<vmem>>, vector<2x16x128xf32>,
    return
  }
  func.func @transform_0(%arg0: i32, %arg1: i32) -> (i32, i32, i32) {
    %c0_i32 = arith.constant 0 : i32
    %c0_i32_0 = arith.constant 0 : i32
    return %arg1, %arg0, %c0_i32 : i32, i32, i32
  }
  func.func @transform_1(%arg0: i32, %arg1: i32) -> (i32, i32) {
    %c0_i32 = arith.constant 0 : i32
    %c0_i32_0 = arith.constant 0 : i32
    return %arg0, %c0_i32 : i32, i32
  }
  func.func @transform_2(%arg0: i32, %arg1: i32) -> (i32, i32) {
    %c0_i32 = arith.constant 0 : i32
    %c0_i32_0 = arith.constant 0 : i32
    return %arg0, %c0_i32 : i32, i32
  }
  func.func @transform_3(%arg0: i32, %arg1: i32) -> (i32, i32, i32) {
    %c0_i32 = arith.constant 0 : i32
    %c0_i32_0 = arith.constant 0 : i32
    return %arg1, %arg0, %c0_i32 : i32, i32, i32
  }
}

</mosaic_0001>

<llo_original>
// kernel: fwd.3
$region0: #{fwd.3}
  #allocation0 [shape = 'u32[]', space=smem, size = 0x4, offset = 0x4, fixed_abs, tag = 'smem constant byte address 0x4 - core index']
  #allocation1 [shape = 'u32[144,128]{1,0:T(1,128)}', space=vmem, size = 0x12000, scoped, tag = 'internal scratch']
  %s0 = inlined_call_operand.hbm [shape: f32[4,16,128], index: 0, kind: input, shape index: {}]
  %s1 = inlined_call_operand.vmem [shape: f32[16,128], index: 1, kind: input, shape index: {}]
  %s2 = inlined_call_operand.vmem [shape: f32[16,128], index: 2, kind: input, shape index: {}]
  %s3 = inlined_call_operand.hbm [shape: f32[4,16,128], index: 3, kind: output, shape index: {}]
  %s4 = sld [smem:[#allocation0]]
  $region49: #{fwd.3} parent=0
    _
  %s6 = ssub.s32 1, %s4
  %s7 = scalar_select 0, %s6, %s4
  $region1: #{fwd.3} parent=0
    #allocation2 [shape = 'u8[32768]{0}', space=vmem, size = 0x8000, scoped, tag = 'input window, operand 0']
    #allocation3 [shape = 's32[2]{0}', space=sflag, size = 0x8, scoped, tag = 'scoped memory for fwd.3']
    #allocation4 [shape = 's32[2]{0}', space=sflag, size = 0x8, scoped, tag = 'scoped memory for fwd.3']
    #allocation5 [shape = 'u8[32768]{0}', space=vmem, size = 0x8000, scoped, tag = 'output window, operand 0']
    %8 = vsyncpa [#allocation3], 0
    %s9 = scalar_lea.sflag [#allocation3], 1
    %10 = vsyncpa %s9, 0
    %11 = vsyncpa [#allocation4], 0
    %s12 = scalar_lea.sflag [#allocation4], 1
    %13 = vsyncpa %s12, 0
    loop: start=0, step=1, limit=4
    $region2: #{fwd.3} parent=1 // loop_pre_header
      _
    $region3: #{fwd.3} parent=1 // loop_header
      %s15 = sphi 0, %s19
      %p16 = scmp.ge.s32.totalorder %s15, 4
      %s22 = sphi 0, %s34
      %s23 = sphi 0, %s30
      %s24 = sphi 0, %s22
      %s25 = sphi 0, %s23
      %s26 = sphi 0, %s24
      %s27 = sphi 0, %s25
      %s39 = sphi 0, %s41
      %s42 = sphi 0, %s39
      %s43 = sphi 0, %s42
      %s59 = sphi 0, %s43
      %s65 = sphi 0, %s67
      %s68 = sphi 0, %s65
      %s69 = sphi 0, %s68
      %s85 = sphi 0, %s69
      %s91 = sphi 0, %s93
      %s94 = sphi 0, %s91
      %s95 = sphi 0, %s94
      %s111 = sphi 0, %s95
      %s119 = sphi 0, %s121
      %s122 = sphi 0, %s119
      %s123 = sphi 0, %s122
      %s139 = sphi 0, %s123
    $region4: #{fwd.3} parent=1 // loop_header_branch
      %18 = sbr.rel (%p16) target = $region8
    $region5: #{fwd.3} parent=1 // loop_body
      %s20 = ssub.s32 %s15, 1
      %s21 = ssub.s32 %s15, 2
      %s28 = sadd.s32 1, %s23
      %p29 = scmp.ge.s32.totalorder %s28, 2
      %s30 = scalar_select %p29, 0, %s28
      %s31 = sadd.s32 1, %s22
      %s32 = scalar_select %p29, %s31, %s22
      %p33 = scmp.ge.s32.totalorder %s32, 1
      %s34 = scalar_select %p33, 0, %s32
      %s35 = ssub.s32 %s23, %s30
      %s36 = ssub.s32 %s22, %s34
      %s37 = sor.u32 %s35, %s36
      %p38 = scmp.eq.s32.totalorder %s37, 0
      %s40 = sadd.s32 %s39, 1
      %s41 = scalar_select %p38, %s39, %s40
      %p44 = pneg %p38
      %p45 = scmp.eq.s32.totalorder %s15, 1
      %p46 = por %p44, %p45
      %p47 = scmp.ne.s32.totalorder %s39, %s42
      %p48 = scmp.eq.s32.totalorder %s15, 0
      %p49 = por %p47, %p48
      %p50 = scmp.ne.s32.totalorder %s39, %s42
      %p51 = scmp.eq.s32.totalorder %s20, 1
      %p52 = por %p50, %p51
      %p53 = scmp.ne.s32.totalorder %s42, %s43
      %p54 = scmp.eq.s32.totalorder %s20, 0
      %p55 = por %p53, %p54
      %p56 = scmp.ne.s32.totalorder %s42, %s43
      %p57 = scmp.eq.s32.totalorder %s21, 1
      %p58 = por %p56, %p57
      %p60 = scmp.ne.s32.totalorder %s43, %s59
      %p61 = scmp.eq.s32.totalorder %s21, 0
      %p62 = por %p60, %p61
      %s63 = ssub.s32 %s22, %s34
      %p64 = scmp.eq.s32.totalorder %s63, 0
      %s66 = sadd.s32 %s65, 1
      %s67 = scalar_select %p64, %s65, %s66
      %p70 = pneg %p64
      %p71 = scmp.eq.s32.totalorder %s15, 1
      %p72 = por %p70, %p71
      %p73 = scmp.ne.s32.totalorder %s65, %s68
      %p74 = scmp.eq.s32.totalorder %s15, 0
      %p75 = por %p73, %p74
      %p76 = scmp.ne.s32.totalorder %s65, %s68
      %p77 = scmp.eq.s32.totalorder %s20, 1
      %p78 = por %p76, %p77
      %p79 = scmp.ne.s32.totalorder %s68, %s69
      %p80 = scmp.eq.s32.totalorder %s20, 0
      %p81 = por %p79, %p80
      %p82 = scmp.ne.s32.totalorder %s68, %s69
      %p83 = scmp.eq.s32.totalorder %s21, 1
      %p84 = por %p82, %p83
      %p86 = scmp.ne.s32.totalorder %s69, %s85
      %p87 = scmp.eq.s32.totalorder %s21, 0
      %p88 = por %p86, %p87
      %s89 = ssub.s32 %s22, %s34
      %p90 = scmp.eq.s32.totalorder %s89, 0
      %s92 = sadd.s32 %s91, 1
      %s93 = scalar_select %p90, %s91, %s92
      %p96 = pneg %p90
      %p97 = scmp.eq.s32.totalorder %s15, 1
      %p98 = por %p96, %p97
      %p99 = scmp.ne.s32.totalorder %s91, %s94
      %p100 = scmp.eq.s32.totalorder %s15, 0
      %p101 = por %p99, %p100
      %p102 = scmp.ne.s32.totalorder %s91, %s94
      %p103 = scmp.eq.s32.totalorder %s20, 1
      %p104 = por %p102, %p103
      %p105 = scmp.ne.s32.totalorder %s94, %s95
      %p106 = scmp.eq.s32.totalorder %s20, 0
      %p107 = por %p105, %p106
      %p108 = scmp.ne.s32.totalorder %s94, %s95
      %p109 = scmp.eq.s32.totalorder %s21, 1
      %p110 = por %p108, %p109
      %p112 = scmp.ne.s32.totalorder %s95, %s111
      %p113 = scmp.eq.s32.totalorder %s21, 0
      %p114 = por %p112, %p113
      %s115 = ssub.s32 %s23, %s30
      %s116 = ssub.s32 %s22, %s34
      %s117 = sor.u32 %s115, %s116
      %p118 = scmp.eq.s32.totalorder %s117, 0
      %s120 = sadd.s32 %s119, 1
      %s121 = scalar_select %p118, %s119, %s120
      %p124 = pneg %p118
      %p125 = scmp.eq.s32.totalorder %s15, 1
      %p126 = por %p124, %p125
      %p127 = scmp.ne.s32.totalorder %s119, %s122
      %p128 = scmp.eq.s32.totalorder %s15, 0
      %p129 = por %p127, %p128
      %p130 = scmp.ne.s32.totalorder %s119, %s122
      %p131 = scmp.eq.s32.totalorder %s20, 1
      %p132 = por %p130, %p131
      %p133 = scmp.ne.s32.totalorder %s122, %s123
      %p134 = scmp.eq.s32.totalorder %s20, 0
      %p135 = por %p133, %p134
      %p136 = scmp.ne.s32.totalorder %s122, %s123
      %p137 = scmp.eq.s32.totalorder %s21, 1
      %p138 = por %p136, %p137
      %p140 = scmp.ne.s32.totalorder %s123, %s139
      %p141 = scmp.eq.s32.totalorder %s21, 0
      %p142 = por %p140, %p141
      %p143 = scmp.le.s32.totalorder 1, %s15
      %p144 = scmp.lt.s32.totalorder %s15, 3
      %p145 = pnand %p143, %p144
      %p146 = pneg %p145
      // Predicated region
      $region9: #{fwd.3} parent=5 // pred_check
        _
      $region10: #{fwd.3} parent=5 // pred_check_branch
        %148 = sbr.rel (%p145) target = $region12
      $region11: #{fwd.3} parent=5 // pred_region
        %s149 = ssub.s32 %s15, 1
        // Predicated region
        $region13: #{fwd.3} parent=11 // pred_check
          %p150 = pneg %p81
        $region14: #{fwd.3} parent=11 // pred_check_branch
          %152 = sbr.rel (%p150) target = $region16
        $region15: #{fwd.3} parent=11 // pred_region
          %s153 = smul.u32 2, %s24
          %p154 = scmp.lt.s32.totalorder %s153, 1
          %s155 = scalar_select %p154, %s153, 1
          %s156 = smul.addr %s155, 8
          %s157 = scalar_lea.vmem %s1, %s156
          %s158 = smul.u32 2, %s24
        $region16: #{fwd.3} parent=11 // pred_fallthru
          _
        // Predicated region
        $region17: #{fwd.3} parent=11 // pred_check
          %p159 = pneg %p107
        $region18: #{fwd.3} parent=11 // pred_check_branch
          %161 = sbr.rel (%p159) target = $region20
        $region19: #{fwd.3} parent=11 // pred_region
          %s162 = smul.u32 2, %s24
          %p163 = scmp.lt.s32.totalorder %s162, 1
          %s164 = scalar_select %p163, %s162, 1
          %s165 = smul.addr %s164, 8
          %s166 = scalar_lea.vmem %s2, %s165
          %s167 = smul.u32 2, %s24
        $region20: #{fwd.3} parent=11 // pred_fallthru
          _
      $region12: #{fwd.3} parent=5 // pred_fallthru
        _
      %p168 = scmp.lt.s32.totalorder %s15, 2
      // Predicated region
      $region21: #{fwd.3} parent=5 // pred_check
        %p169 = pneg %p168
      $region22: #{fwd.3} parent=5 // pred_check_branch
        %171 = sbr.rel (%p169) target = $region24
      $region23: #{fwd.3} parent=5 // pred_region
        // Predicated region
        $region25: #{fwd.3} parent=23 // pred_check
          %p172 = pneg %p49
        $region26: #{fwd.3} parent=23 // pred_check_branch
          %174 = sbr.rel (%p172) target = $region28
        $region27: #{fwd.3} parent=23 // pred_region
          %s175 = sand.u32 %s39, 1
          %s176 = scalar_lea.sflag [#allocation3], %s175
          %s177 = sand.u32 %s39, 1
          %s178 = smul.addr %s177, 32
          %s179 = scalar_lea.vmem [#allocation2], %s178
          %s180 = smul.u32 2, %s23
          %s181 = smul.u32 2, %s22
          %s183 = ssub.s32 512, 512
          %184 = vsyncadd %s176, %s183
          %s185 = smul.addr %s180, 2
          %s186 = sadd.s32 %s181, %s185
          %s187 = smul.addr %s186, 128
          %s188 = scalar_lea.hbm %s0, %s187
          %s189 = sshll.u32 %s179, 4
          %s190 = int_to_ptr.vmem [resolvable:$true] %s189
          %195 = dma.hbm_to_vmem [thread:$0]  %s188, 512, %s190, %s176, 128, 128, 8
        $region28: #{fwd.3} parent=23 // pred_fallthru
          _
      $region24: #{fwd.3} parent=5 // pred_fallthru
        _
      %p196 = scmp.le.s32.totalorder 1, %s15
      %p197 = scmp.lt.s32.totalorder %s15, 3
      %p198 = pnand %p196, %p197
      %p199 = pneg %p198
      // Predicated region
      $region29: #{fwd.3} parent=5 // pred_check
        _
      $region30: #{fwd.3} parent=5 // pred_check_branch
        %201 = sbr.rel (%p198) target = $region32
      $region31: #{fwd.3} parent=5 // pred_region
        %s202 = ssub.s32 %s15, 1
        %s203 = sand.u32 %s42, 1
        %s204 = scalar_lea.sflag [#allocation3], %s203
        %s205 = sand.u32 %s42, 1
        %s206 = smul.addr %s205, 32
        %s207 = scalar_lea.vmem [#allocation2], %s206
        // Predicated region
        $region33: #{fwd.3} parent=31 // pred_check
          %p208 = pneg %p55
        $region34: #{fwd.3} parent=31 // pred_check_branch
          %210 = sbr.rel (%p208) target = $region36
        $region35: #{fwd.3} parent=31 // pred_region
          %211 = dma.done %s204, 512
        $region36: #{fwd.3} parent=31 // pred_fallthru
          _
        %s212 = sand.u32 %s42, 1
        %s213 = scalar_lea.sflag [#allocation3], %s212
        %s214 = sand.u32 %s42, 1
        %s215 = smul.addr %s214, 32
        %s216 = scalar_lea.vmem [#allocation2], %s215
        %p217 = pneg %p55
        %p218 = pneg %p52
        %s219 = smul.u32 2, %s24
        %p220 = scmp.lt.s32.totalorder %s219, 1
        %s221 = scalar_select %p220, %s219, 1
        %s222 = smul.addr %s221, 8
        %s223 = scalar_lea.vmem %s1, %s222
        %p224 = pneg %p81
        %p225 = pneg %p78
        %s226 = smul.u32 2, %s24
        %p227 = scmp.lt.s32.totalorder %s226, 1
        %s228 = scalar_select %p227, %s226, 1
        %s229 = smul.addr %s228, 8
        %s230 = scalar_lea.vmem %s2, %s229
        %p231 = pneg %p107
        %p232 = pneg %p104
        %p233 = pneg %p135
        %p234 = pneg %p132
        %s235 = sand.u32 %s122, 1
        %s236 = scalar_lea.sflag [#allocation4], %s235
        %s237 = sand.u32 %s122, 1
        %s238 = smul.addr %s237, 32
        %s239 = scalar_lea.vmem [#allocation5], %s238
        %s240 = smul.u32 2, %s25
        %s241 = smul.u32 2, %s24
        %s242 = smul.u32 2, %s24
        %p243 = scmp.lt.s32.totalorder %s242, 1
        %s244 = scalar_select %p243, %s242, 1
        %s245 = smul.addr %s244, 8
        %s246 = scalar_lea.vmem %s1, %s245
        %s247 = smul.u32 2, %s24
        %s248 = smul.u32 2, %s24
        %p249 = scmp.lt.s32.totalorder %s248, 1
        %s250 = scalar_select %p249, %s248, 1
        %s251 = smul.addr %s250, 8
        %s252 = scalar_lea.vmem %s2, %s251
        %s253 = smul.u32 2, %s24
        %s254 = smul.u32 2, %s25
        %s255 = smul.u32 2, %s24
        %v256 = vld [vmem:[%s207] sm:$0xff]
        %v257 = vld [vmem:[%s207 + $0x8] sm:$0xff]
        %v258 = vld [vmem:[%s207 + $0x10] sm:$0xff]
        %v259 = vld [vmem:[%s207 + $0x18] sm:$0xff]
        %260 = vrot.lane.b32.xlu0 %v256, 127
        %v261 = vpop.permute.xlu0 %260
        %262 = vrot.lane.b32.xlu0 %v257, 127
        %v263 = vpop.permute.xlu0 %262
        %264 = vrot.lane.b32.xlu0 %v258, 127
        %v265 = vpop.permute.xlu0 %264
        %266 = vrot.lane.b32.xlu0 %v259, 127
        %v267 = vpop.permute.xlu0 %266
        %268 = vrot.lane.b32.xlu0 %v256, 1
        %v269 = vpop.permute.xlu0 %268
        %270 = vrot.lane.b32.xlu0 %v257, 1
        %v271 = vpop.permute.xlu0 %270
        %272 = vrot.lane.b32.xlu0 %v258, 1
        %v273 = vpop.permute.xlu0 %272
        %274 = vrot.lane.b32.xlu0 %v259, 1
        %v275 = vpop.permute.xlu0 %274
        %v276 = vlaneseq
        %v277 = vand.u32 %v276, 127
        %vm278 = vcmp.lt.s32.totalorder %v277, 0
        %v279 = vsub.s32 0, %v277
        %v280 = vsel %vm278, %v279, %v277
        %v281 = vshrl.u32 %v280, 1
        %v282 = vand.u32 %v280, 1
        %v283 = vsub.s32 0, %v282
        %v284 = vsel %vm278, %v283, %v282
        %vm285 = vcmp.ne.s32.totalorder %v284, 0
        %vm286 = vcmp.lt.s32.totalorder %v284, 0
        %vm287 = vmand %vm286, %vm285
        %v288 = vadd.s32 %v284, 2
        %v289 = vsel %vm287, %v288, %v284
        %vm290 = vcmp.eq.s32.totalorder %v289, 0
        %v291 = vsel %vm290, %v261, %v269
        %v292 = vsel %vm290, %v263, %v271
        %v293 = vsel %vm290, %v265, %v273
        %v294 = vsel %vm290, %v267, %v275
        %v295 = vld [vmem:[%s246] sm:$0xff]
        %v296 = vld [vmem:[%s246 + $0x8] sm:$0xff]
        %v297 = vmul.f32 %v295, %v256
        %v298 = vmul.f32 %v296, %v257
        %v299 = vmul.f32 %v295, %v258
        %v300 = vmul.f32 %v296, %v259
        %v301 = vld [vmem:[%s252] sm:$0xff]
        %v302 = vld [vmem:[%s252 + $0x8] sm:$0xff]
        %v303 = vmul.f32 %v301, %v291
        %v304 = vmul.f32 %v302, %v292
        %v305 = vmul.f32 %v301, %v293
        %v306 = vmul.f32 %v302, %v294
        %v307 = vadd.f32 %v297, %v303
        %v308 = vadd.f32 %v298, %v304
        %v309 = vadd.f32 %v299, %v305
        %v310 = vadd.f32 %v300, %v306
        %311 = vst [vmem:[%s239] sm:$0xff] %v307
        %312 = vst [vmem:[%s239 + $0x8] sm:$0xff] %v308
        %313 = vst [vmem:[%s239 + $0x10] sm:$0xff] %v309
        %314 = vst [vmem:[%s239 + $0x18] sm:$0xff] %v310
        %s315 = sand.u32 %s122, 1
        %s316 = scalar_lea.sflag [#allocation4], %s315
        %s317 = sand.u32 %s122, 1
        %s318 = smul.addr %s317, 32
        %s319 = scalar_lea.vmem [#allocation5], %s318
        // Predicated region
        $region37: #{fwd.3} parent=31 // pred_check
          %p320 = pneg %p132
        $region38: #{fwd.3} parent=31 // pred_check_branch
          %322 = sbr.rel (%p320) target = $region40
        $region39: #{fwd.3} parent=31 // pred_region
          %s323 = smul.u32 2, %s25
          %s324 = smul.u32 2, %s24
          %s326 = ssub.s32 512, 512
          %327 = vsyncadd %s316, %s326
          %s328 = smul.addr %s323, 2
          %s329 = sadd.s32 %s324, %s328
          %s330 = smul.addr %s329, 128
          %s331 = scalar_lea.hbm %s3, %s330
          %s332 = sshll.u32 %s319, 4
          %s333 = int_to_ptr.vmem [resolvable:$true] %s332
          %338 = dma.vmem_to_hbm [thread:$0]  %s333, 512, %s331, %s316, 128, 128, 8
        $region40: #{fwd.3} parent=31 // pred_fallthru
          _
      $region32: #{fwd.3} parent=5 // pred_fallthru
        _
      %p339 = scmp.le.s32.totalorder 2, %s15
      // Predicated region
      $region41: #{fwd.3} parent=5 // pred_check
        %p340 = pneg %p339
      $region42: #{fwd.3} parent=5 // pred_check_branch
        %342 = sbr.rel (%p340) target = $region44
      $region43: #{fwd.3} parent=5 // pred_region
        %s343 = ssub.s32 %s15, 2
        // Predicated region
        $region45: #{fwd.3} parent=43 // pred_check
          %p344 = pneg %p138
        $region46: #{fwd.3} parent=43 // pred_check_branch
          %346 = sbr.rel (%p344) target = $region48
        $region47: #{fwd.3} parent=43 // pred_region
          %s347 = sand.u32 %s123, 1
          %s348 = scalar_lea.sflag [#allocation4], %s347
          %s349 = sand.u32 %s123, 1
          %s350 = smul.addr %s349, 32
          %s351 = scalar_lea.vmem [#allocation5], %s350
          %352 = dma.done %s348, 512
        $region48: #{fwd.3} parent=43 // pred_fallthru
          _
      $region44: #{fwd.3} parent=5 // pred_fallthru
        _
    $region6: #{fwd.3} parent=1 // loop_footer
      %s19 = sadd.s32 1, %s15
    $region7: #{fwd.3} parent=1 // loop_footer_branch
      %14 = sbr.rel target = $region3
    $region8: #{fwd.3} parent=1 // loop_exit
      _
    %353 = vsyncpa [#allocation3], 1
    %s354 = scalar_lea.sflag [#allocation3], 1
    %355 = vsyncpa %s354, 1
    %356 = vsyncpa [#allocation4], 1
    %s357 = scalar_lea.sflag [#allocation4], 1
    %358 = vsyncpa %s357, 1

// kernel: fwd.2
$region0: #{fwd.2}
  #allocation0 [shape = 'u32[]', space=smem, size = 0x4, offset = 0x4, fixed_abs, tag = 'smem constant byte address 0x4 - core index']
  #allocation1 [shape = 'u32[144,128]{1,0:T(1,128)}', space=vmem, size = 0x12000, scoped, tag = 'internal scratch']
  %s0 = inlined_call_operand.vmem [shape: f32[8,16,128], index: 0, kind: input, shape index: {}]
  %s1 = inlined_call_operand.vmem [shape: f32[16,128], index: 1, kind: input, shape index: {}]
  %s2 = inlined_call_operand.vmem [shape: f32[16,128], index: 2, kind: input, shape index: {}]
  %s3 = inlined_call_operand.hbm [shape: f32[8,16,128], index: 3, kind: output, shape index: {}]
  %s4 = sld [smem:[#allocation0]]
  $region45: #{fwd.2} parent=0
    _
  %s6 = ssub.s32 1, %s4
  %s7 = scalar_select 0, %s6, %s4
  $region1: #{fwd.2} parent=0
    #allocation2 [shape = 'u8[65536]{0}', space=vmem, size = 0x10000, scoped, tag = 'output window, operand 0']
    #allocation3 [shape = 's32[2]{0}', space=sflag, size = 0x8, scoped, tag = 'scoped memory for fwd.2']
    %8 = vsyncpa [#allocation3], 0
    %s9 = scalar_lea.sflag [#allocation3], 1
    %10 = vsyncpa %s9, 0
    loop: start=0, step=1, limit=4
    $region2: #{fwd.2} parent=1 // loop_pre_header
      _
    $region3: #{fwd.2} parent=1 // loop_header
      %s12 = sphi 0, %s16
      %p13 = scmp.ge.s32.totalorder %s12, 4
      %s19 = sphi 0, %s31
      %s20 = sphi 0, %s27
      %s21 = sphi 0, %s19
      %s22 = sphi 0, %s20
      %s23 = sphi 0, %s21
      %s24 = sphi 0, %s22
      %s36 = sphi 0, %s38
      %s39 = sphi 0, %s36
      %s40 = sphi 0, %s39
      %s56 = sphi 0, %s40
      %s62 = sphi 0, %s64
      %s65 = sphi 0, %s62
      %s66 = sphi 0, %s65
      %s82 = sphi 0, %s66
      %s88 = sphi 0, %s90
      %s91 = sphi 0, %s88
      %s92 = sphi 0, %s91
      %s108 = sphi 0, %s92
      %s116 = sphi 0, %s118
      %s119 = sphi 0, %s116
      %s120 = sphi 0, %s119
      %s136 = sphi 0, %s120
    $region4: #{fwd.2} parent=1 // loop_header_branch
      %15 = sbr.rel (%p13) target = $region8
    $region5: #{fwd.2} parent=1 // loop_body
      %s17 = ssub.s32 %s12, 1
      %s18 = ssub.s32 %s12, 2
      %s25 = sadd.s32 1, %s20
      %p26 = scmp.ge.s32.totalorder %s25, 2
      %s27 = scalar_select %p26, 0, %s25
      %s28 = sadd.s32 1, %s19
      %s29 = scalar_select %p26, %s28, %s19
      %p30 = scmp.ge.s32.totalorder %s29, 1
      %s31 = scalar_select %p30, 0, %s29
      %s32 = ssub.s32 %s20, %s27
      %s33 = ssub.s32 %s19, %s31
      %s34 = sor.u32 %s32, %s33
      %p35 = scmp.eq.s32.totalorder %s34, 0
      %s37 = sadd.s32 %s36, 1
      %s38 = scalar_select %p35, %s36, %s37
      %p41 = pneg %p35
      %p42 = scmp.eq.s32.totalorder %s12, 1
      %p43 = por %p41, %p42
      %p44 = scmp.ne.s32.totalorder %s36, %s39
      %p45 = scmp.eq.s32.totalorder %s12, 0
      %p46 = por %p44, %p45
      %p47 = scmp.ne.s32.totalorder %s36, %s39
      %p48 = scmp.eq.s32.totalorder %s17, 1
      %p49 = por %p47, %p48
      %p50 = scmp.ne.s32.totalorder %s39, %s40
      %p51 = scmp.eq.s32.totalorder %s17, 0
      %p52 = por %p50, %p51
      %p53 = scmp.ne.s32.totalorder %s39, %s40
      %p54 = scmp.eq.s32.totalorder %s18, 1
      %p55 = por %p53, %p54
      %p57 = scmp.ne.s32.totalorder %s40, %s56
      %p58 = scmp.eq.s32.totalorder %s18, 0
      %p59 = por %p57, %p58
      %s60 = ssub.s32 %s19, %s31
      %p61 = scmp.eq.s32.totalorder %s60, 0
      %s63 = sadd.s32 %s62, 1
      %s64 = scalar_select %p61, %s62, %s63
      %p67 = pneg %p61
      %p68 = scmp.eq.s32.totalorder %s12, 1
      %p69 = por %p67, %p68
      %p70 = scmp.ne.s32.totalorder %s62, %s65
      %p71 = scmp.eq.s32.totalorder %s12, 0
      %p72 = por %p70, %p71
      %p73 = scmp.ne.s32.totalorder %s62, %s65
      %p74 = scmp.eq.s32.totalorder %s17, 1
      %p75 = por %p73, %p74
      %p76 = scmp.ne.s32.totalorder %s65, %s66
      %p77 = scmp.eq.s32.totalorder %s17, 0
      %p78 = por %p76, %p77
      %p79 = scmp.ne.s32.totalorder %s65, %s66
      %p80 = scmp.eq.s32.totalorder %s18, 1
      %p81 = por %p79, %p80
      %p83 = scmp.ne.s32.totalorder %s66, %s82
      %p84 = scmp.eq.s32.totalorder %s18, 0
      %p85 = por %p83, %p84
      %s86 = ssub.s32 %s19, %s31
      %p87 = scmp.eq.s32.totalorder %s86, 0
      %s89 = sadd.s32 %s88, 1
      %s90 = scalar_select %p87, %s88, %s89
      %p93 = pneg %p87
      %p94 = scmp.eq.s32.totalorder %s12, 1
      %p95 = por %p93, %p94
      %p96 = scmp.ne.s32.totalorder %s88, %s91
      %p97 = scmp.eq.s32.totalorder %s12, 0
      %p98 = por %p96, %p97
      %p99 = scmp.ne.s32.totalorder %s88, %s91
      %p100 = scmp.eq.s32.totalorder %s17, 1
      %p101 = por %p99, %p100
      %p102 = scmp.ne.s32.totalorder %s91, %s92
      %p103 = scmp.eq.s32.totalorder %s17, 0
      %p104 = por %p102, %p103
      %p105 = scmp.ne.s32.totalorder %s91, %s92
      %p106 = scmp.eq.s32.totalorder %s18, 1
      %p107 = por %p105, %p106
      %p109 = scmp.ne.s32.totalorder %s92, %s108
      %p110 = scmp.eq.s32.totalorder %s18, 0
      %p111 = por %p109, %p110
      %s112 = ssub.s32 %s20, %s27
      %s113 = ssub.s32 %s19, %s31
      %s114 = sor.u32 %s112, %s113
      %p115 = scmp.eq.s32.totalorder %s114, 0
      %s117 = sadd.s32 %s116, 1
      %s118 = scalar_select %p115, %s116, %s117
      %p121 = pneg %p115
      %p122 = scmp.eq.s32.totalorder %s12, 1
      %p123 = por %p121, %p122
      %p124 = scmp.ne.s32.totalorder %s116, %s119
      %p125 = scmp.eq.s32.totalorder %s12, 0
      %p126 = por %p124, %p125
      %p127 = scmp.ne.s32.totalorder %s116, %s119
      %p128 = scmp.eq.s32.totalorder %s17, 1
      %p129 = por %p127, %p128
      %p130 = scmp.ne.s32.totalorder %s119, %s120
      %p131 = scmp.eq.s32.totalorder %s17, 0
      %p132 = por %p130, %p131
      %p133 = scmp.ne.s32.totalorder %s119, %s120
      %p134 = scmp.eq.s32.totalorder %s18, 1
      %p135 = por %p133, %p134
      %p137 = scmp.ne.s32.totalorder %s120, %s136
      %p138 = scmp.eq.s32.totalorder %s18, 0
      %p139 = por %p137, %p138
      %p140 = scmp.le.s32.totalorder 1, %s12
      %p141 = scmp.lt.s32.totalorder %s12, 3
      %p142 = pnand %p140, %p141
      %p143 = pneg %p142
      // Predicated region
      $region9: #{fwd.2} parent=5 // pred_check
        _
      $region10: #{fwd.2} parent=5 // pred_check_branch
        %145 = sbr.rel (%p142) target = $region12
      $region11: #{fwd.2} parent=5 // pred_region
        %s146 = ssub.s32 %s12, 1
        // Predicated region
        $region13: #{fwd.2} parent=11 // pred_check
          %p147 = pneg %p78
        $region14: #{fwd.2} parent=11 // pred_check_branch
          %149 = sbr.rel (%p147) target = $region16
        $region15: #{fwd.2} parent=11 // pred_region
          %s150 = smul.u32 2, %s21
          %p151 = scmp.lt.s32.totalorder %s150, 1
          %s152 = scalar_select %p151, %s150, 1
          %s153 = smul.addr %s152, 8
          %s154 = scalar_lea.vmem %s1, %s153
          %s155 = smul.u32 2, %s21
        $region16: #{fwd.2} parent=11 // pred_fallthru
          _
        // Predicated region
        $region17: #{fwd.2} parent=11 // pred_check
          %p156 = pneg %p104
        $region18: #{fwd.2} parent=11 // pred_check_branch
          %158 = sbr.rel (%p156) target = $region20
        $region19: #{fwd.2} parent=11 // pred_region
          %s159 = smul.u32 2, %s21
          %p160 = scmp.lt.s32.totalorder %s159, 1
          %s161 = scalar_select %p160, %s159, 1
          %s162 = smul.addr %s161, 8
          %s163 = scalar_lea.vmem %s2, %s162
          %s164 = smul.u32 2, %s21
        $region20: #{fwd.2} parent=11 // pred_fallthru
          _
      $region12: #{fwd.2} parent=5 // pred_fallthru
        _
      %p165 = scmp.lt.s32.totalorder %s12, 2
      // Predicated region
      $region21: #{fwd.2} parent=5 // pred_check
        %p166 = pneg %p165
      $region22: #{fwd.2} parent=5 // pred_check_branch
        %168 = sbr.rel (%p166) target = $region24
      $region23: #{fwd.2} parent=5 // pred_region
        // Predicated region
        $region25: #{fwd.2} parent=23 // pred_check
          %p169 = pneg %p46
        $region26: #{fwd.2} parent=23 // pred_check_branch
          %171 = sbr.rel (%p169) target = $region28
        $region27: #{fwd.2} parent=23 // pred_region
          %s172 = smul.u32 4, %s20
          %s173 = smul.u32 2, %s19
          %p174 = scmp.lt.s32.totalorder %s172, 7
          %s175 = scalar_select %p174, %s172, 7
          %p176 = scmp.lt.s32.totalorder %s173, 1
          %s177 = scalar_select %p176, %s173, 1
          %s178 = smul.addr %s175, 2
          %s179 = sadd.s32 %s177, %s178
          %s180 = smul.addr %s179, 8
          %s181 = scalar_lea.vmem %s0, %s180
          %s182 = smul.u32 4, %s20
          %s183 = smul.u32 2, %s19
        $region28: #{fwd.2} parent=23 // pred_fallthru
          _
      $region24: #{fwd.2} parent=5 // pred_fallthru
        _
      %p184 = scmp.le.s32.totalorder 1, %s12
      %p185 = scmp.lt.s32.totalorder %s12, 3
      %p186 = pnand %p184, %p185
      %p187 = pneg %p186
      // Predicated region
      $region29: #{fwd.2} parent=5 // pred_check
        _
      $region30: #{fwd.2} parent=5 // pred_check_branch
        %189 = sbr.rel (%p186) target = $region32
      $region31: #{fwd.2} parent=5 // pred_region
        %s190 = ssub.s32 %s12, 1
        %s191 = smul.u32 4, %s22
        %s192 = smul.u32 2, %s21
        %p193 = scmp.lt.s32.totalorder %s191, 7
        %s194 = scalar_select %p193, %s191, 7
        %p195 = scmp.lt.s32.totalorder %s192, 1
        %s196 = scalar_select %p195, %s192, 1
        %s197 = smul.addr %s194, 2
        %s198 = sadd.s32 %s196, %s197
        %s199 = smul.addr %s198, 8
        %s200 = scalar_lea.vmem %s0, %s199
        %p201 = pneg %p52
        %p202 = pneg %p49
        %s203 = smul.u32 2, %s21
        %p204 = scmp.lt.s32.totalorder %s203, 1
        %s205 = scalar_select %p204, %s203, 1
        %s206 = smul.addr %s205, 8
        %s207 = scalar_lea.vmem %s1, %s206
        %p208 = pneg %p78
        %p209 = pneg %p75
        %s210 = smul.u32 2, %s21
        %p211 = scmp.lt.s32.totalorder %s210, 1
        %s212 = scalar_select %p211, %s210, 1
        %s213 = smul.addr %s212, 8
        %s214 = scalar_lea.vmem %s2, %s213
        %p215 = pneg %p104
        %p216 = pneg %p101
        %p217 = pneg %p132
        %p218 = pneg %p129
        %s219 = sand.u32 %s119, 1
        %s220 = scalar_lea.sflag [#allocation3], %s219
        %s221 = sand.u32 %s119, 1
        %s222 = smul.addr %s221, 64
        %s223 = scalar_lea.vmem [#allocation2], %s222
        %s224 = smul.u32 4, %s22
        %s225 = smul.u32 2, %s21
        %p226 = scmp.lt.s32.totalorder %s224, 7
        %s227 = scalar_select %p226, %s224, 7
        %p228 = scmp.lt.s32.totalorder %s225, 1
        %s229 = scalar_select %p228, %s225, 1
        %s230 = smul.addr %s227, 2
        %s231 = sadd.s32 %s229, %s230
        %s232 = smul.addr %s231, 8
        %s233 = scalar_lea.vmem %s0, %s232
        %s234 = smul.u32 4, %s22
        %s235 = smul.u32 2, %s21
        %s236 = smul.u32 2, %s21
        %p237 = scmp.lt.s32.totalorder %s236, 1
        %s238 = scalar_select %p237, %s236, 1
        %s239 = smul.addr %s238, 8
        %s240 = scalar_lea.vmem %s1, %s239
        %s241 = smul.u32 2, %s21
        %s242 = smul.u32 2, %s21
        %p243 = scmp.lt.s32.totalorder %s242, 1
        %s244 = scalar_select %p243, %s242, 1
        %s245 = smul.addr %s244, 8
        %s246 = scalar_lea.vmem %s2, %s245
        %s247 = smul.u32 2, %s21
        %s248 = smul.u32 4, %s22
        %s249 = smul.u32 2, %s21
        %v250 = vld [vmem:[%s233] sm:$0xff]
        %v251 = vld [vmem:[%s233 + $0x8] sm:$0xff]
        %v252 = vld [vmem:[%s233 + $0x10] sm:$0xff]
        %v253 = vld [vmem:[%s233 + $0x18] sm:$0xff]
        %v254 = vld [vmem:[%s233 + $0x20] sm:$0xff]
        %v255 = vld [vmem:[%s233 + $0x28] sm:$0xff]
        %v256 = vld [vmem:[%s233 + $0x30] sm:$0xff]
        %v257 = vld [vmem:[%s233 + $0x38] sm:$0xff]
        %258 = vrot.lane.b32.xlu0 %v250, 127
        %v259 = vpop.permute.xlu0 %258
        %260 = vrot.lane.b32.xlu0 %v251, 127
        %v261 = vpop.permute.xlu0 %260
        %262 = vrot.lane.b32.xlu0 %v252, 127
        %v263 = vpop.permute.xlu0 %262
        %264 = vrot.lane.b32.xlu0 %v253, 127
        %v265 = vpop.permute.xlu0 %264
        %266 = vrot.lane.b32.xlu0 %v254, 127
        %v267 = vpop.permute.xlu0 %266
        %268 = vrot.lane.b32.xlu0 %v255, 127
        %v269 = vpop.permute.xlu0 %268
        %270 = vrot.lane.b32.xlu0 %v256, 127
        %v271 = vpop.permute.xlu0 %270
        %272 = vrot.lane.b32.xlu0 %v257, 127
        %v273 = vpop.permute.xlu0 %272
        %274 = vrot.lane.b32.xlu0 %v250, 1
        %v275 = vpop.permute.xlu0 %274
        %276 = vrot.lane.b32.xlu0 %v251, 1
        %v277 = vpop.permute.xlu0 %276
        %278 = vrot.lane.b32.xlu0 %v252, 1
        %v279 = vpop.permute.xlu0 %278
        %280 = vrot.lane.b32.xlu0 %v253, 1
        %v281 = vpop.permute.xlu0 %280
        %282 = vrot.lane.b32.xlu0 %v254, 1
        %v283 = vpop.permute.xlu0 %282
        %284 = vrot.lane.b32.xlu0 %v255, 1
        %v285 = vpop.permute.xlu0 %284
        %286 = vrot.lane.b32.xlu0 %v256, 1
        %v287 = vpop.permute.xlu0 %286
        %288 = vrot.lane.b32.xlu0 %v257, 1
        %v289 = vpop.permute.xlu0 %288
        %v290 = vlaneseq
        %v291 = vand.u32 %v290, 127
        %vm292 = vcmp.lt.s32.totalorder %v291, 0
        %v293 = vsub.s32 0, %v291
        %v294 = vsel %vm292, %v293, %v291
        %v295 = vshrl.u32 %v294, 1
        %v296 = vand.u32 %v294, 1
        %v297 = vsub.s32 0, %v296
        %v298 = vsel %vm292, %v297, %v296
        %vm299 = vcmp.ne.s32.totalorder %v298, 0
        %vm300 = vcmp.lt.s32.totalorder %v298, 0
        %vm301 = vmand %vm300, %vm299
        %v302 = vadd.s32 %v298, 2
        %v303 = vsel %vm301, %v302, %v298
        %vm304 = vcmp.eq.s32.totalorder %v303, 0
        %v305 = vsel %vm304, %v259, %v275
        %v306 = vsel %vm304, %v261, %v277
        %v307 = vsel %vm304, %v263, %v279
        %v308 = vsel %vm304, %v265, %v281
        %v309 = vsel %vm304, %v267, %v283
        %v310 = vsel %vm304, %v269, %v285
        %v311 = vsel %vm304, %v271, %v287
        %v312 = vsel %vm304, %v273, %v289
        %v313 = vld [vmem:[%s240] sm:$0xff]
        %v314 = vld [vmem:[%s240 + $0x8] sm:$0xff]
        %v315 = vmul.f32 %v313, %v250
        %v316 = vmul.f32 %v314, %v251
        %v317 = vmul.f32 %v313, %v252
        %v318 = vmul.f32 %v314, %v253
        %v319 = vmul.f32 %v313, %v254
        %v320 = vmul.f32 %v314, %v255
        %v321 = vmul.f32 %v313, %v256
        %v322 = vmul.f32 %v314, %v257
        %v323 = vld [vmem:[%s246] sm:$0xff]
        %v324 = vld [vmem:[%s246 + $0x8] sm:$0xff]
        %v325 = vmul.f32 %v323, %v305
        %v326 = vmul.f32 %v324, %v306
        %v327 = vmul.f32 %v323, %v307
        %v328 = vmul.f32 %v324, %v308
        %v329 = vmul.f32 %v323, %v309
        %v330 = vmul.f32 %v324, %v310
        %v331 = vmul.f32 %v323, %v311
        %v332 = vmul.f32 %v324, %v312
        %v333 = vadd.f32 %v315, %v325
        %v334 = vadd.f32 %v316, %v326
        %v335 = vadd.f32 %v317, %v327
        %v336 = vadd.f32 %v318, %v328
        %v337 = vadd.f32 %v319, %v329
        %v338 = vadd.f32 %v320, %v330
        %v339 = vadd.f32 %v321, %v331
        %v340 = vadd.f32 %v322, %v332
        %341 = vst [vmem:[%s223] sm:$0xff] %v333
        %342 = vst [vmem:[%s223 + $0x8] sm:$0xff] %v334
        %343 = vst [vmem:[%s223 + $0x10] sm:$0xff] %v335
        %344 = vst [vmem:[%s223 + $0x18] sm:$0xff] %v336
        %345 = vst [vmem:[%s223 + $0x20] sm:$0xff] %v337
        %346 = vst [vmem:[%s223 + $0x28] sm:$0xff] %v338
        %347 = vst [vmem:[%s223 + $0x30] sm:$0xff] %v339
        %348 = vst [vmem:[%s223 + $0x38] sm:$0xff] %v340
        %s349 = sand.u32 %s119, 1
        %s350 = scalar_lea.sflag [#allocation3], %s349
        %s351 = sand.u32 %s119, 1
        %s352 = smul.addr %s351, 64
        %s353 = scalar_lea.vmem [#allocation2], %s352
        // Predicated region
        $region33: #{fwd.2} parent=31 // pred_check
          %p354 = pneg %p129
        $region34: #{fwd.2} parent=31 // pred_check_branch
          %356 = sbr.rel (%p354) target = $region36
        $region35: #{fwd.2} parent=31 // pred_region
          %s357 = smul.u32 4, %s22
          %s358 = smul.u32 2, %s21
          %s360 = ssub.s32 1024, 1024
          %361 = vsyncadd %s350, %s360
          %s362 = smul.addr %s357, 2
          %s363 = sadd.s32 %s358, %s362
          %s364 = smul.addr %s363, 128
          %s365 = scalar_lea.hbm %s3, %s364
          %s366 = sshll.u32 %s353, 4
          %s367 = int_to_ptr.vmem [resolvable:$true] %s366
          %372 = dma.vmem_to_hbm [thread:$0]  %s367, 1024, %s365, %s350, 128, 128, 8
        $region36: #{fwd.2} parent=31 // pred_fallthru
          _
      $region32: #{fwd.2} parent=5 // pred_fallthru
        _
      %p373 = scmp.le.s32.totalorder 2, %s12
      // Predicated region
      $region37: #{fwd.2} parent=5 // pred_check
        %p374 = pneg %p373
      $region38: #{fwd.2} parent=5 // pred_check_branch
        %376 = sbr.rel (%p374) target = $region40
      $region39: #{fwd.2} parent=5 // pred_region
        %s377 = ssub.s32 %s12, 2
        // Predicated region
        $region41: #{fwd.2} parent=39 // pred_check
          %p378 = pneg %p135
        $region42: #{fwd.2} parent=39 // pred_check_branch
          %380 = sbr.rel (%p378) target = $region44
        $region43: #{fwd.2} parent=39 // pred_region
          %s381 = sand.u32 %s120, 1
          %s382 = scalar_lea.sflag [#allocation3], %s381
          %s383 = sand.u32 %s120, 1
          %s384 = smul.addr %s383, 64
          %s385 = scalar_lea.vmem [#allocation2], %s384
          %386 = dma.done %s382, 1024
        $region44: #{fwd.2} parent=39 // pred_fallthru
          _
      $region40: #{fwd.2} parent=5 // pred_fallthru
        _
    $region6: #{fwd.2} parent=1 // loop_footer
      %s16 = sadd.s32 1, %s12
    $region7: #{fwd.2} parent=1 // loop_footer_branch
      %11 = sbr.rel target = $region3
    $region8: #{fwd.2} parent=1 // loop_exit
      _
    %387 = vsyncpa [#allocation3], 1
    %s388 = scalar_lea.sflag [#allocation3], 1
    %389 = vsyncpa %s388, 1

</llo_original>
